<compile_context>
chip_gen: v7x
topology: tpu7x:2x2x1
jax: 0.10.0
libtpu: 0.0.40
codegen_flags: <defaults>
</compile_context>

<pallas_src>
import functools

import jax
import jax.numpy as jnp
from jax.experimental import pallas as pl
from jax.experimental.pallas import tpu as pltpu


def _round_up(x, m):
    return ((x + m - 1) // m) * m


def _cdiv(a, b):
    return (a + b - 1) // b


def _choose_batch_tile(batch, cap=512):
    """Batch tile: multiple of 16, <= cap, >= 2 grid steps when batch > 16."""
    if batch <= 16:
        return 16
    n_tiles = max(2, _cdiv(batch, cap))          # v7x megacore: give both TCs work
    return min(cap, _round_up(_cdiv(batch, n_tiles), 16))


# ----------------------------------------------------------------------------
# Kernel
# ----------------------------------------------------------------------------
def discriminator_kernel(x_ref, w1_ref, w2_ref, w3_ref, b_ref, o_ref,
                         *, lane1, lane2, lane3):
    """One batch tile: fc1+relu -> fc2+relu -> fused heads -> relu -> sigmoid.

    x_ref  : (TB, in_size)      f32   (cast to bf16 in-kernel)
    w1_ref : (in_size, lane1)   bf16
    w2_ref : (lane1, lane2)     bf16
    w3_ref : (lane2, lane3)     bf16  [fc31 | fc32] fused heads
    b_ref  : (3, lane1)         f32   row 0 = b1, row 1 = b2, row 2 = b31|b32
    o_ref  : (TB, lane3)        bf16  col 0 = score, cols 1.. = label
    """
    x = x_ref[...].astype(jnp.bfloat16)

    # fc1 + relu (f32 accumulation, f32 elementwise)
    h1 = jnp.dot(x, w1_ref[...], preferred_element_type=jnp.float32)
    h1 = jnp.maximum(h1 + b_ref[0:1, :lane1], 0.0)

    # fc2 + relu
    h2 = jnp.dot(h1.astype(jnp.bfloat16), w2_ref[...],
                 preferred_element_type=jnp.float32)
    h2 = jnp.maximum(h2 + b_ref[1:2, :lane2], 0.0)

    # fused heads (fc31 | fc32) -> relu -> sigmoid, single lane-dense bf16 store
    h3 = jnp.dot(h2.astype(jnp.bfloat16), w3_ref[...],
                 preferred_element_type=jnp.float32)
    h3 = jnp.maximum(h3 + b_ref[2:3, :lane3], 0.0)
    o_ref[...] = jax.nn.sigmoid(h3).astype(o_ref.dtype)


# ----------------------------------------------------------------------------
# Parameter packing (per-layer lane widths)
# ----------------------------------------------------------------------------
def pack_params(params, in_size):
    h1 = in_size // 2
    h2 = in_size // 4
    n_lab = in_size // 8
    lane1 = _round_up(h1, 128)
    lane2 = _round_up(h2, 128)
    lane3 = _round_up(1 + n_lab, 128)        # lane3 <= lane2 <= lane1

    w1 = jnp.zeros((in_size, lane1), jnp.float32).at[:, :h1].set(
        params["w1"]).astype(jnp.bfloat16)
    w2 = jnp.zeros((lane1, lane2), jnp.float32).at[:h1, :h2].set(
        params["w2"]).astype(jnp.bfloat16)
    w3 = jnp.zeros((lane2, lane3), jnp.float32)
    w3 = w3.at[:h2, 0:1].set(params["w31"])
    w3 = w3.at[:h2, 1:1 + n_lab].set(params["w32"])
    w3 = w3.astype(jnp.bfloat16)

    b = jnp.zeros((3, lane1), jnp.float32)
    b = b.at[0, :h1].set(params["b1"][0])
    b = b.at[1, :h2].set(params["b2"][0])
    b = b.at[2, 0:1].set(params["b31"][0])
    b = b.at[2, 1:1 + n_lab].set(params["b32"][0])
    return (w1, w2, w3, b), (lane1, lane2, lane3)


# ----------------------------------------------------------------------------
# Wrapper
# ----------------------------------------------------------------------------
def discriminator_forward(x, params):
    """x: (B, inSize) f32. Returns (score (B,1), label (B, inSize//8))."""
    B, in_size = x.shape
    assert in_size % 8 == 0, "inSize (= xn*yn) must be divisible by 8"
    n_lab = in_size // 8

    (w1, w2, w3, b), (lane1, lane2, lane3) = pack_params(params, in_size)

    # Batch tiling: tile chosen from B (multiple of 16, <= 512, >= 2 steps
    # when B > 16); only the ragged tail is zero-padded, x stays f32.
    TB = _choose_batch_tile(B)
    B_pad = _round_up(B, TB)
    x_in = x if B_pad == B else jnp.pad(x, ((0, B_pad - B), (0, 0)))
    grid = B_pad // TB

    kernel = functools.partial(discriminator_kernel,
                               lane1=lane1, lane2=lane2, lane3=lane3)

    # Cost estimate: helps XLA overlap this small custom call.
    flops = 2 * B_pad * (in_size * lane1 + lane1 * lane2 + lane2 * lane3)
    bytes_accessed = (B_pad * in_size * 4              # x (f32)
                      + (w1.size + w2.size + w3.size) * 2   # bf16 weights
                      + b.size * 4                     # f32 biases
                      + B_pad * lane3 * 2)             # bf16 output
    cost = pl.CostEstimate(flops=int(flops),
                           transcendentals=int(B_pad * lane3),
                           bytes_accessed=int(bytes_accessed))

    # Explicit VMEM budget sized from the real buffers (important on v5e's
    # 16 MiB default scoped limit and v7x's 64 MiB physical VMEM).
    w_bytes = (w1.size + w2.size + w3.size) * 2
    b_bytes = 8 * lane1 * 4
    x_tile_bytes = TB * in_size * 4
    o_tile_bytes = TB * lane3 * 2
    act_bytes = TB * (lane1 + lane2 + lane3) * 4
    vmem_limit = 2 * (w_bytes + b_bytes + x_tile_bytes + o_tile_bytes) \
        + act_bytes + (2 << 20)
    vmem_limit = int(min(max(vmem_limit, 4 << 20), 64 << 20))

    def run(single_buffer_weights):
        def resident_spec(shape):
            # Constant index_map -> fetched once; single-buffer to halve the
            # resident weight VMEM footprint.
            if single_buffer_weights:
                return pl.BlockSpec(shape, lambda i: (0, 0),
                                    pipeline_mode=pl.Buffered(1))
            return pl.BlockSpec(shape, lambda i: (0, 0))

        return pl.pallas_call(
            kernel,
            out_shape=jax.ShapeDtypeStruct((B_pad, lane3), jnp.bfloat16),
            grid=(grid,),
            in_specs=[
                pl.BlockSpec((TB, in_size), lambda i: (i, 0)),   # x tile (f32)
                resident_spec(w1.shape),
                resident_spec(w2.shape),
                resident_spec(w3.shape),
                resident_spec(b.shape),
            ],
            out_specs=pl.BlockSpec((TB, lane3), lambda i: (i, 0)),
            compiler_params=pltpu.CompilerParams(
                dimension_semantics=("parallel",),
                vmem_limit_bytes=vmem_limit),
            cost_estimate=cost,
        )(x_in, w1, w2, w3, b)

    try:
        out = run(True)
    except Exception:
        # TODO(synk): drop fallback once Buffered(1) resident operands are
        # supported by the pallas_call pipeliner on all deployed jax versions.
        out = run(False)

    score = out[:B, 0:1].astype(jnp.float32)
    label = out[:B, 1:1 + n_lab].astype(jnp.float32)
    return score, label


# ----------------------------------------------------------------------------
# Init / references
# ----------------------------------------------------------------------------
def init_params(key, in_size):
    """Mimic nn.Linear's U(-1/sqrt(fan_in), 1/sqrt(fan_in)); weights (in, out)."""
    dims = [(in_size, in_size // 2),
            (in_size // 2, in_size // 4),
            (in_size // 4, 1),
            (in_size // 4, in_size // 8)]
    names = ["1", "2", "31", "32"]
    params = {}
    for name, (fin, fout) in zip(names, dims):
        key, kw, kb = jax.random.split(key, 3)
        bound = 1.0 / jnp.sqrt(jnp.float32(fin))
        params["w" + name] = jax.random.uniform(
            kw, (fin, fout), jnp.float32, minval=-bound, maxval=bound)
        params["b" + name] = jax.random.uniform(
            kb, (1, fout), jnp.float32, minval=-bound, maxval=bound)
    return params


def reference_forward_bf16(x, params):
    """Pure-JAX reference with the SAME bf16-matmul / f32-accum / bf16-output
    semantics as the kernel."""
    def mm(a, w):
        return jnp.dot(a.astype(jnp.bfloat16), w.astype(jnp.bfloat16),
                       preferred_element_type=jnp.float32)
    h1 = jax.nn.relu(mm(x, params["w1"]) + params["b1"])
    h2 = jax.nn.relu(mm(h1, params["w2"]) + params["b2"])
    score = jax.nn.sigmoid(jax.nn.relu(mm(h2, params["w31"]) + params["b31"]))
    label = jax.nn.sigmoid(jax.nn.relu(mm(h2, params["w32"]) + params["b32"]))
    return (score.astype(jnp.bfloat16).astype(jnp.float32),
            label.astype(jnp.bfloat16).astype(jnp.float32))


def reference_forward_f32(x, params):
    """Full-f32 reference of the original PyTorch forward (loose check)."""
    h1 = jax.nn.relu(x @ params["w1"] + params["b1"])
    h2 = jax.nn.relu(h1 @ params["w2"] + params["b2"])
    score = jax.nn.sigmoid(jax.nn.relu(h2 @ params["w31"] + params["b31"]))
    label = jax.nn.sigmoid(jax.nn.relu(h2 @ params["w32"] + params["b32"]))
    return score, label


def _check(x, params, in_size):
    score, label = discriminator_forward(x, params)
    score, label = jax.block_until_ready((score, label))
    B = x.shape[0]
    assert score.shape == (B, 1)
    assert label.shape == (B, in_size // 8)

    # Tight check against a reference with identical bf16 semantics
    # (final outputs of both are bf16-rounded; tolerance covers ULP wiggle).
    ref_s, ref_l = reference_forward_bf16(x, params)
    assert jnp.allclose(score, ref_s, atol=4e-3, rtol=4e-3)
    assert jnp.allclose(label, ref_l, atol=4e-3, rtol=4e-3)

    # Loose sanity check against the original full-f32 module semantics.
    f32_s, f32_l = reference_forward_f32(x, params)
    assert jnp.allclose(score, f32_s, atol=5e-2)
    assert jnp.allclose(label, f32_l, atol=5e-2)


if __name__ == "__main__":
    # Small shapes consistent with the module: xn = yn = 8 -> inSize = 64.
    xn, yn = 8, 8
    in_size = xn * yn          # 64
    batch = 2

    key = jax.random.PRNGKey(0)
    key, kx, kx2 = jax.random.split(key, 3)
    params = init_params(key, in_size)

    # Case 1: tiny batch (single grid step).
    x = jax.random.normal(kx, (batch, in_size), jnp.float32)
    _check(x, params, in_size)

    # Case 2: multi-tile grid with a ragged batch tail (exercises padding and
    # the >= 2-step grid used for v7x megacore).
    x2 = jax.random.normal(kx2, (48, in_size), jnp.float32)
    _check(x2, params, in_size)

    print("KERNEL_OK")
</pallas_src>

<mosaic_0001>
module attributes {stable_mosaic.version = 11 : i64} {
  func.func @discriminator_kernel(%arg0: i32, %arg1: memref<16x64xf32, #tpu.memory_space<vmem>>, %arg2: memref<64x128xbf16, #tpu.memory_space<vmem>>, %arg3: memref<128x128xbf16, #tpu.memory_space<vmem>>, %arg4: memref<128x128xbf16, #tpu.memory_space<vmem>>, %arg5: memref<3x128xf32, #tpu.memory_space<vmem>>, %arg6: memref<16x128xbf16, #tpu.memory_space<vmem>>) attributes {dimension_semantics = [#tpu.dimension_semantics<parallel>], iteration_bounds = array<i64: 1>, scalar_prefetch = 0 : i64, scratch_operands = 0 : i64, tpu.core_type = #tpu.core_type<tc>, window_params = [{transform_indices = @transform_0, window_bounds = array<i64: 16, 64>}, {pipeline_mode = #tpu.pipeline_mode<synchronous>, transform_indices = @transform_1, window_bounds = array<i64: 64, 128>}, {pipeline_mode = #tpu.pipeline_mode<synchronous>, transform_indices = @transform_2, window_bounds = array<i64: 128, 128>}, {pipeline_mode = #tpu.pipeline_mode<synchronous>, transform_indices = @transform_3, window_bounds = array<i64: 128, 128>}, {pipeline_mode = #tpu.pipeline_mode<synchronous>, transform_indices = @transform_4, window_bounds = array<i64: 3, 128>}, {transform_indices = @transform_5, window_bounds = array<i64: 16, 128>}]} {
    %c0 = arith.constant 0 : index
    %c0_0 = arith.constant 0 : index
    %0 = vector.load %arg1[%c0, %c0_0] : memref<16x64xf32, #tpu.memory_space<vmem>>, vector<16x64xf32>
    %1 = arith.truncf %0 : vector<16x64xf32> to vector<16x64xbf16>
    %c0_1 = arith.constant 0 : index
    %c0_2 = arith.constant 0 : index
    %2 = vector.load %arg2[%c0_1, %c0_2] : memref<64x128xbf16, #tpu.memory_space<vmem>>, vector<64x128xbf16>
    %cst = arith.constant dense<0.000000e+00> : vector<16x128xf32>
    %3 = tpu.matmul %1, %2, %cst {dimension_numbers = #tpu.dot_dimension_numbers<[1], [0], [0], [1], [0, 0, 1, 1], [], []>} : vector<16x64xbf16>, vector<64x128xbf16>, vector<16x128xf32> -> vector<16x128xf32>
    %c0_3 = arith.constant 0 : index
    %c0_4 = arith.constant 0 : index
    %4 = vector.load %arg5[%c0_3, %c0_4] : memref<3x128xf32, #tpu.memory_space<vmem>>, vector<1x128xf32>
    %5 = vector.broadcast %4 : vector<1x128xf32> to vector<16x128xf32>
    %6 = arith.addf %3, %5 : vector<16x128xf32>
    %cst_5 = arith.constant 0.000000e+00 : f32
    %7 = vector.broadcast %cst_5 : f32 to vector<16x128xf32>
    %8 = arith.maximumf %6, %7 : vector<16x128xf32>
    %9 = arith.truncf %8 : vector<16x128xf32> to vector<16x128xbf16>
    %c0_6 = arith.constant 0 : index
    %c0_7 = arith.constant 0 : index
    %10 = vector.load %arg3[%c0_6, %c0_7] : memref<128x128xbf16, #tpu.memory_space<vmem>>, vector<128x128xbf16>
    %cst_8 = arith.constant dense<0.000000e+00> : vector<16x128xf32>
    %11 = tpu.matmul %9, %10, %cst_8 {dimension_numbers = #tpu.dot_dimension_numbers<[1], [0], [0], [1], [0, 0, 1, 1], [], []>} : vector<16x128xbf16>, vector<128x128xbf16>, vector<16x128xf32> -> vector<16x128xf32>
    %c1 = arith.constant 1 : index
    %c0_9 = arith.constant 0 : index
    %12 = vector.load %arg5[%c1, %c0_9] : memref<3x128xf32, #tpu.memory_space<vmem>>, vector<1x128xf32>
    %13 = vector.broadcast %12 : vector<1x128xf32> to vector<16x128xf32>
    %14 = arith.addf %11, %13 : vector<16x128xf32>
    %cst_10 = arith.constant 0.000000e+00 : f32
    %15 = vector.broadcast %cst_10 : f32 to vector<16x128xf32>
    %16 = arith.maximumf %14, %15 : vector<16x128xf32>
    %17 = arith.truncf %16 : vector<16x128xf32> to vector<16x128xbf16>
    %c0_11 = arith.constant 0 : index
    %c0_12 = arith.constant 0 : index
    %18 = vector.load %arg4[%c0_11, %c0_12] : memref<128x128xbf16, #tpu.memory_space<vmem>>, vector<128x128xbf16>
    %cst_13 = arith.constant dense<0.000000e+00> : vector<16x128xf32>
    %19 = tpu.matmul %17, %18, %cst_13 {dimension_numbers = #tpu.dot_dimension_numbers<[1], [0], [0], [1], [0, 0, 1, 1], [], []>} : vector<16x128xbf16>, vector<128x128xbf16>, vector<16x128xf32> -> vector<16x128xf32>
    %c2 = arith.constant 2 : index
    %c0_14 = arith.constant 0 : index
    %20 = vector.load %arg5[%c2, %c0_14] : memref<3x128xf32, #tpu.memory_space<vmem>>, vector<1x128xf32>
    %21 = vector.broadcast %20 : vector<1x128xf32> to vector<16x128xf32>
    %22 = arith.addf %19, %21 : vector<16x128xf32>
    %cst_15 = arith.constant 0.000000e+00 : f32
    %23 = vector.broadcast %cst_15 : f32 to vector<16x128xf32>
    %24 = arith.maximumf %22, %23 : vector<16x128xf32>
    %25 = arith.negf %24 : vector<16x128xf32>
    %26 = math.exp %25 : vector<16x128xf32>
    %cst_16 = arith.constant 1.000000e+00 : f32
    %27 = vector.broadcast %cst_16 : f32 to vector<16x128xf32>
    %28 = arith.addf %27, %26 : vector<16x128xf32>
    %29 = arith.divf %27, %28 : vector<16x128xf32>
    %30 = arith.truncf %29 : vector<16x128xf32> to vector<16x128xbf16>
    %c0_17 = arith.constant 0 : index
    %c0_18 = arith.constant 0 : index
    %31 = vector.load %arg6[%c0_17, %c0_18] : memref<16x128xbf16, #tpu.memory_space<vmem>>, vector<16x128xbf16>
    tpu.vector_store %arg6[%c0_17, %c0_18], %30 {strides = array<i32>} : memref<16x128xbf16, #tpu.memory_space<vmem>>, vector<16x128xbf16>,
    return
  }
  func.func @transform_0(%arg0: i32) -> (i32, i32) {
    %c0_i32 = arith.constant 0 : i32
    %c0_i32_0 = arith.constant 0 : i32
    return %arg0, %c0_i32 : i32, i32
  }
  func.func @transform_1(%arg0: i32) -> (i32, i32) {
    %c0_i32 = arith.constant 0 : i32
    %c0_i32_0 = arith.constant 0 : i32
    %c0_i32_1 = arith.constant 0 : i32
    return %c0_i32, %c0_i32_0 : i32, i32
  }
  func.func @transform_2(%arg0: i32) -> (i32, i32) {
    %c0_i32 = arith.constant 0 : i32
    %c0_i32_0 = arith.constant 0 : i32
    %c0_i32_1 = arith.constant 0 : i32
    return %c0_i32, %c0_i32_0 : i32, i32
  }
  func.func @transform_3(%arg0: i32) -> (i32, i32) {
    %c0_i32 = arith.constant 0 : i32
    %c0_i32_0 = arith.constant 0 : i32
    %c0_i32_1 = arith.constant 0 : i32
    return %c0_i32, %c0_i32_0 : i32, i32
  }
  func.func @transform_4(%arg0: i32) -> (i32, i32) {
    %c0_i32 = arith.constant 0 : i32
    %c0_i32_0 = arith.constant 0 : i32
    %c0_i32_1 = arith.constant 0 : i32
    return %c0_i32, %c0_i32_0 : i32, i32
  }
  func.func @transform_5(%arg0: i32) -> (i32, i32) {
    %c0_i32 = arith.constant 0 : i32
    %c0_i32_0 = arith.constant 0 : i32
    return %arg0, %c0_i32 : i32, i32
  }
}

module attributes {stable_mosaic.version = 11 : i64} {
  func.func @discriminator_kernel(%arg0: i32, %arg1: memref<16x64xf32, #tpu.memory_space<vmem>>, %arg2: memref<64x128xbf16, #tpu.memory_space<vmem>>, %arg3: memref<128x128xbf16, #tpu.memory_space<vmem>>, %arg4: memref<128x128xbf16, #tpu.memory_space<vmem>>, %arg5: memref<3x128xf32, #tpu.memory_space<vmem>>, %arg6: memref<16x128xbf16, #tpu.memory_space<vmem>>) attributes {dimension_semantics = [#tpu.dimension_semantics<parallel>], iteration_bounds = array<i64: 1>, scalar_prefetch = 0 : i64, scratch_operands = 0 : i64, tpu.core_type = #tpu.core_type<tc>, window_params = [{transform_indices = @transform_0, window_bounds = array<i64: 16, 64>}, {pipeline_mode = #tpu.pipeline_mode<synchronous>, transform_indices = @transform_1, window_bounds = array<i64: 64, 128>}, {pipeline_mode = #tpu.pipeline_mode<synchronous>, transform_indices = @transform_2, window_bounds = array<i64: 128, 128>}, {pipeline_mode = #tpu.pipeline_mode<synchronous>, transform_indices = @transform_3, window_bounds = array<i64: 128, 128>}, {pipeline_mode = #tpu.pipeline_mode<synchronous>, transform_indices = @transform_4, window_bounds = array<i64: 3, 128>}, {transform_indices = @transform_5, window_bounds = array<i64: 16, 128>}]} {
    %c0 = arith.constant 0 : index
    %c0_0 = arith.constant 0 : index
    %0 = vector.load %arg1[%c0, %c0_0] : memref<16x64xf32, #tpu.memory_space<vmem>>, vector<16x64xf32>
    %1 = arith.truncf %0 : vector<16x64xf32> to vector<16x64xbf16>
    %c0_1 = arith.constant 0 : index
    %c0_2 = arith.constant 0 : index
    %2 = vector.load %arg2[%c0_1, %c0_2] : memref<64x128xbf16, #tpu.memory_space<vmem>>, vector<64x128xbf16>
    %cst = arith.constant dense<0.000000e+00> : vector<16x128xf32>
    %3 = tpu.matmul %1, %2, %cst {dimension_numbers = #tpu.dot_dimension_numbers<[1], [0], [0], [1], [0, 0, 1, 1], [], []>} : vector<16x64xbf16>, vector<64x128xbf16>, vector<16x128xf32> -> vector<16x128xf32>
    %c0_3 = arith.constant 0 : index
    %c0_4 = arith.constant 0 : index
    %4 = vector.load %arg5[%c0_3, %c0_4] : memref<3x128xf32, #tpu.memory_space<vmem>>, vector<1x128xf32>
    %5 = vector.broadcast %4 : vector<1x128xf32> to vector<16x128xf32>
    %6 = arith.addf %3, %5 : vector<16x128xf32>
    %cst_5 = arith.constant 0.000000e+00 : f32
    %7 = vector.broadcast %cst_5 : f32 to vector<16x128xf32>
    %8 = arith.maximumf %6, %7 : vector<16x128xf32>
    %9 = arith.truncf %8 : vector<16x128xf32> to vector<16x128xbf16>
    %c0_6 = arith.constant 0 : index
    %c0_7 = arith.constant 0 : index
    %10 = vector.load %arg3[%c0_6, %c0_7] : memref<128x128xbf16, #tpu.memory_space<vmem>>, vector<128x128xbf16>
    %cst_8 = arith.constant dense<0.000000e+00> : vector<16x128xf32>
    %11 = tpu.matmul %9, %10, %cst_8 {dimension_numbers = #tpu.dot_dimension_numbers<[1], [0], [0], [1], [0, 0, 1, 1], [], []>} : vector<16x128xbf16>, vector<128x128xbf16>, vector<16x128xf32> -> vector<16x128xf32>
    %c1 = arith.constant 1 : index
    %c0_9 = arith.constant 0 : index
    %12 = vector.load %arg5[%c1, %c0_9] : memref<3x128xf32, #tpu.memory_space<vmem>>, vector<1x128xf32>
    %13 = vector.broadcast %12 : vector<1x128xf32> to vector<16x128xf32>
    %14 = arith.addf %11, %13 : vector<16x128xf32>
    %cst_10 = arith.constant 0.000000e+00 : f32
    %15 = vector.broadcast %cst_10 : f32 to vector<16x128xf32>
    %16 = arith.maximumf %14, %15 : vector<16x128xf32>
    %17 = arith.truncf %16 : vector<16x128xf32> to vector<16x128xbf16>
    %c0_11 = arith.constant 0 : index
    %c0_12 = arith.constant 0 : index
    %18 = vector.load %arg4[%c0_11, %c0_12] : memref<128x128xbf16, #tpu.memory_space<vmem>>, vector<128x128xbf16>
    %cst_13 = arith.constant dense<0.000000e+00> : vector<16x128xf32>
    %19 = tpu.matmul %17, %18, %cst_13 {dimension_numbers = #tpu.dot_dimension_numbers<[1], [0], [0], [1], [0, 0, 1, 1], [], []>} : vector<16x128xbf16>, vector<128x128xbf16>, vector<16x128xf32> -> vector<16x128xf32>
    %c2 = arith.constant 2 : index
    %c0_14 = arith.constant 0 : index
    %20 = vector.load %arg5[%c2, %c0_14] : memref<3x128xf32, #tpu.memory_space<vmem>>, vector<1x128xf32>
    %21 = vector.broadcast %20 : vector<1x128xf32> to vector<16x128xf32>
    %22 = arith.addf %19, %21 : vector<16x128xf32>
    %cst_15 = arith.constant 0.000000e+00 : f32
    %23 = vector.broadcast %cst_15 : f32 to vector<16x128xf32>
    %24 = arith.maximumf %22, %23 : vector<16x128xf32>
    %25 = arith.negf %24 : vector<16x128xf32>
    %26 = math.exp %25 : vector<16x128xf32>
    %cst_16 = arith.constant 1.000000e+00 : f32
    %27 = vector.broadcast %cst_16 : f32 to vector<16x128xf32>
    %28 = arith.addf %27, %26 : vector<16x128xf32>
    %29 = arith.divf %27, %28 : vector<16x128xf32>
    %30 = arith.truncf %29 : vector<16x128xf32> to vector<16x128xbf16>
    %c0_17 = arith.constant 0 : index
    %c0_18 = arith.constant 0 : index
    %31 = vector.load %arg6[%c0_17, %c0_18] : memref<16x128xbf16, #tpu.memory_space<vmem>>, vector<16x128xbf16>
    tpu.vector_store %arg6[%c0_17, %c0_18], %30 {strides = array<i32>} : memref<16x128xbf16, #tpu.memory_space<vmem>>, vector<16x128xbf16>,
    return
  }
  func.func @transform_0(%arg0: i32) -> (i32, i32) {
    %c0_i32 = arith.constant 0 : i32
    %c0_i32_0 = arith.constant 0 : i32
    return %arg0, %c0_i32 : i32, i32
  }
  func.func @transform_1(%arg0: i32) -> (i32, i32) {
    %c0_i32 = arith.constant 0 : i32
    %c0_i32_0 = arith.constant 0 : i32
    %c0_i32_1 = arith.constant 0 : i32
    return %c0_i32, %c0_i32_0 : i32, i32
  }
  func.func @transform_2(%arg0: i32) -> (i32, i32) {
    %c0_i32 = arith.constant 0 : i32
    %c0_i32_0 = arith.constant 0 : i32
    %c0_i32_1 = arith.constant 0 : i32
    return %c0_i32, %c0_i32_0 : i32, i32
  }
  func.func @transform_3(%arg0: i32) -> (i32, i32) {
    %c0_i32 = arith.constant 0 : i32
    %c0_i32_0 = arith.constant 0 : i32
    %c0_i32_1 = arith.constant 0 : i32
    return %c0_i32, %c0_i32_0 : i32, i32
  }
  func.func @transform_4(%arg0: i32) -> (i32, i32) {
    %c0_i32 = arith.constant 0 : i32
    %c0_i32_0 = arith.constant 0 : i32
    %c0_i32_1 = arith.constant 0 : i32
    return %c0_i32, %c0_i32_0 : i32, i32
  }
  func.func @transform_5(%arg0: i32) -> (i32, i32) {
    %c0_i32 = arith.constant 0 : i32
    %c0_i32_0 = arith.constant 0 : i32
    return %arg0, %c0_i32 : i32, i32
  }
}

</mosaic_0001>

<llo_original>
// kernel: tpu_custom_call.1
$region0: #{tpu_custom_call.1}
  #allocation0 [shape = 'u32[]', space=smem, size = 0x4, offset = 0x4, fixed_abs, tag = 'smem constant byte address 0x4 - core index']
  #allocation1 [shape = 'u32[144,128]{1,0:T(1,128)}', space=vmem, size = 0x12000, scoped, tag = 'internal scratch']
  %s0 = inlined_call_operand.hbm [shape: f32[16,64], index: 0, kind: input, shape index: {}]
  %s1 = inlined_call_operand.hbm [shape: bf16[64,128], index: 1, kind: input, shape index: {}]
  %s2 = inlined_call_operand.hbm [shape: bf16[128,128], index: 2, kind: input, shape index: {}]
  %s3 = inlined_call_operand.hbm [shape: bf16[128,128], index: 3, kind: input, shape index: {}]
  %s4 = inlined_call_operand.vmem [shape: f32[3,128], index: 4, kind: input, shape index: {}]
  %s5 = inlined_call_operand.hbm [shape: bf16[16,128], index: 5, kind: output, shape index: {}]
  %s6 = sld [smem:[#allocation0]]
  $region46: #{tpu_custom_call.1} parent=0
    _
  %s8 = ssub.s32 1, %s6
  %s9 = scalar_select 0, %s8, %s6
  $region1: #{tpu_custom_call.1} parent=0
    #allocation2 [shape = 'u8[8192]{0}', space=vmem, size = 0x2000, scoped, tag = 'input window, operand 0, single buffered']
    #allocation3 [shape = 's32[1]{0}', space=sflag, size = 0x4, scoped, tag = 'scoped memory for tpu_custom_call.1']
    #allocation4 [shape = 's32[1]{0}', space=sflag, size = 0x4, scoped, tag = 'scoped memory for tpu_custom_call.1']
    #allocation5 [shape = 'u8[16384]{0}', space=vmem, size = 0x4000, scoped, tag = 'input window, operand 1, single buffered']
    #allocation6 [shape = 's32[1]{0}', space=sflag, size = 0x4, scoped, tag = 'scoped memory for tpu_custom_call.1']
    #allocation7 [shape = 'u8[32768]{0}', space=vmem, size = 0x8000, scoped, tag = 'input window, operand 2, single buffered']
    #allocation8 [shape = 'u8[32768]{0}', space=vmem, size = 0x8000, scoped, tag = 'input window, operand 3, single buffered']
    #allocation9 [shape = 's32[1]{0}', space=sflag, size = 0x4, scoped, tag = 'scoped memory for tpu_custom_call.1']
    #allocation10 [shape = 'u8[4096]{0}', space=vmem, size = 0x1000, scoped, tag = 'output window, operand 0, single buffered']
    %10 = vsyncpa [#allocation3], 0
    %11 = vsyncpa [#allocation6], 0
    %12 = vsyncpa [#allocation9], 0
    %13 = vsyncpa [#allocation4], 0
    // Predicated region
    $region2: #{tpu_custom_call.1} parent=1 // pred_check
      _
    $region3: #{tpu_custom_call.1} parent=1 // pred_check_branch
      %15 = sbr.rel (0) target = $region5
    $region4: #{tpu_custom_call.1} parent=1 // pred_region
      %s17 = ssub.s32 256, 256
      %18 = vsyncadd [#allocation3], %s17
      %s19 = sshll.u32 [#allocation2], 4
      %s20 = int_to_ptr.vmem [resolvable:$true] %s19
      %25 = dma.hbm_to_vmem [thread:$0]  %s0, 256, %s20, [#allocation3], 128, 128, 8
    $region5: #{tpu_custom_call.1} parent=1 // pred_fallthru
      _
    // Predicated region
    $region6: #{tpu_custom_call.1} parent=1 // pred_check
      _
    $region7: #{tpu_custom_call.1} parent=1 // pred_check_branch
      %27 = sbr.rel (0) target = $region9
    $region8: #{tpu_custom_call.1} parent=1 // pred_region
      %s29 = ssub.s32 512, 512
      %30 = vsyncadd [#allocation6], %s29
      %s31 = sshll.u32 [#allocation5], 4
      %s32 = int_to_ptr.vmem [resolvable:$true] %s31
      %37 = dma.hbm_to_vmem [thread:$0]  %s1, 512, %s32, [#allocation6], 64, 64, 4
    $region9: #{tpu_custom_call.1} parent=1 // pred_fallthru
      _
    // Predicated region
    $region10: #{tpu_custom_call.1} parent=1 // pred_check
      _
    $region11: #{tpu_custom_call.1} parent=1 // pred_check_branch
      %39 = sbr.rel (0) target = $region13
    $region12: #{tpu_custom_call.1} parent=1 // pred_region
      %s41 = ssub.s32 1024, 1024
      %42 = vsyncadd [#allocation6], %s41
      %s43 = sshll.u32 [#allocation7], 4
      %s44 = int_to_ptr.vmem [resolvable:$true] %s43
      %49 = dma.hbm_to_vmem [thread:$0]  %s2, 1024, %s44, [#allocation6], 64, 64, 4
    $region13: #{tpu_custom_call.1} parent=1 // pred_fallthru
      _
    // Predicated region
    $region14: #{tpu_custom_call.1} parent=1 // pred_check
      _
    $region15: #{tpu_custom_call.1} parent=1 // pred_check_branch
      %51 = sbr.rel (0) target = $region17
    $region16: #{tpu_custom_call.1} parent=1 // pred_region
      %s53 = ssub.s32 1024, 1024
      %54 = vsyncadd [#allocation9], %s53
      %s55 = sshll.u32 [#allocation8], 4
      %s56 = int_to_ptr.vmem [resolvable:$true] %s55
      %61 = dma.hbm_to_vmem [thread:$0]  %s3, 1024, %s56, [#allocation9], 64, 64, 4
    $region17: #{tpu_custom_call.1} parent=1 // pred_fallthru
      _
    // Predicated region
    $region18: #{tpu_custom_call.1} parent=1 // pred_check
      _
    $region19: #{tpu_custom_call.1} parent=1 // pred_check_branch
      %63 = sbr.rel (0) target = $region21
    $region20: #{tpu_custom_call.1} parent=1 // pred_region
      _
    $region21: #{tpu_custom_call.1} parent=1 // pred_fallthru
      _
    // Predicated region
    $region22: #{tpu_custom_call.1} parent=1 // pred_check
      _
    $region23: #{tpu_custom_call.1} parent=1 // pred_check_branch
      %65 = sbr.rel (0) target = $region25
    $region24: #{tpu_custom_call.1} parent=1 // pred_region
      %66 = dma.done [#allocation3], 256
    $region25: #{tpu_custom_call.1} parent=1 // pred_fallthru
      _
    // Predicated region
    $region26: #{tpu_custom_call.1} parent=1 // pred_check
      _
    $region27: #{tpu_custom_call.1} parent=1 // pred_check_branch
      %68 = sbr.rel (0) target = $region29
    $region28: #{tpu_custom_call.1} parent=1 // pred_region
      %69 = dma.done [#allocation6], 512
    $region29: #{tpu_custom_call.1} parent=1 // pred_fallthru
      _
    // Predicated region
    $region30: #{tpu_custom_call.1} parent=1 // pred_check
      _
    $region31: #{tpu_custom_call.1} parent=1 // pred_check_branch
      %71 = sbr.rel (0) target = $region33
    $region32: #{tpu_custom_call.1} parent=1 // pred_region
      %72 = dma.done [#allocation6], 1024
    $region33: #{tpu_custom_call.1} parent=1 // pred_fallthru
      _
    // Predicated region
    $region34: #{tpu_custom_call.1} parent=1 // pred_check
      _
    $region35: #{tpu_custom_call.1} parent=1 // pred_check_branch
      %74 = sbr.rel (0) target = $region37
    $region36: #{tpu_custom_call.1} parent=1 // pred_region
      %75 = dma.done [#allocation9], 1024
    $region37: #{tpu_custom_call.1} parent=1 // pred_fallthru
      _
    %v77 = vld [vmem:[#allocation2] sm:$0xff]
    %v78 = vld [vmem:[#allocation2 + $0x8] sm:$0xff]
    %v79 = vpack.c.bf16 %v78, %v77
    %v80 = vld [vmem:[#allocation5] sm:$0xf]
    %v81 = vld [vmem:[#allocation5 + $0x4] sm:$0xf]
    %v82 = vld [vmem:[#allocation5 + $0x8] sm:$0xf]
    %v83 = vld [vmem:[#allocation5 + $0xc] sm:$0xf]
    %v84 = vld [vmem:[#allocation5 + $0x10] sm:$0xf]
    %v85 = vld [vmem:[#allocation5 + $0x14] sm:$0xf]
    %v86 = vld [vmem:[#allocation5 + $0x18] sm:$0xf]
    %v87 = vld [vmem:[#allocation5 + $0x1c] sm:$0xf]
    %v88 = vld [vmem:[%s4] sm:$0x1]
    %v89 = vlaneseq
    %v90 = vshrl.u32 %v89, 7
    %v91 = vsub.s32 0, %v90
    %v92 = vrot.slane %v88, %v91
    %v101 = vunpack.c.l.b16 %v80
    %v102 = vunpack.c.l.b16 %v81
    %v103 = vunpack.c.l.b16 %v82
    %v104 = vunpack.c.l.b16 %v83
    %v105 = vunpack.c.l.b16 %v84
    %v106 = vunpack.c.l.b16 %v85
    %v107 = vunpack.c.l.b16 %v86
    %v108 = vunpack.c.l.b16 %v87
    %v109 = vpack.c.b16 %v102, %v101
    %v110 = vpack.c.b16 %v104, %v103
    %v111 = vpack.c.b16 %v106, %v105
    %v112 = vpack.c.b16 %v108, %v107
    %vm117 = vcmask 523264
    %v119 = vsel %vm117, %v79, 0
    %121 = vmatprep.subr.bf16.mxu0 0
    %122 = vmatpush1.bf16.msra.mxu0 %v109
    %123 = vmatprep.subr.bf16.mxu0 0
    %124 = vmatpush1.bf16.msra.mxu0 %v110
    %125 = vmatprep.subr.bf16.mxu0 0
    %126 = vmatpush1.bf16.msra.mxu0 %v111
    %127 = vmatprep.subr.bf16.mxu0 0
    %128 = vmatpush1.bf16.msra.mxu0 %v112
    %129 = vmatprep.subr.bf16.mxu0 0
    %130 = vmatpush1.bf16.msra.mxu0 0
    %131 = vmatprep.subr.bf16.mxu0 0
    %132 = vmatpush1.bf16.msra.mxu0 0
    %133 = vmatprep.subr.bf16.mxu0 0
    %134 = vmatpush1.bf16.msra.mxu0 0
    %135 = vmatprep.subr.bf16.mxu0 0
    %136 = vmatpush1.bf16.msra.mxu0 0
    %137 = vmatprep.subr.bf16.mxu0 0
    %138 = vmatpush1.bf16.msra.mxu0 0
    %139 = vmatprep.subr.bf16.mxu0 0
    %140 = vmatpush1.bf16.msra.mxu0 0
    %141 = vmatprep.subr.bf16.mxu0 0
    %142 = vmatpush1.bf16.msra.mxu0 0
    %143 = vmatprep.subr.bf16.mxu0 0
    %144 = vmatpush1.bf16.msra.mxu0 0
    %145 = vmatprep.subr.bf16.mxu0 0
    %146 = vmatpush1.bf16.msra.mxu0 0
    %147 = vmatprep.subr.bf16.mxu0 0
    %148 = vmatpush1.bf16.msra.mxu0 0
    %149 = vmatprep.subr.bf16.mxu0 0
    %150 = vmatpush1.bf16.msra.mxu0 0
    %151 = vmatprep.subr.bf16.mxu0 0
    %152 = vmatpush1.bf16.msra.mxu0 0
    %153 = vmatprep.mubr.bf16.mxu0 0
    %154 = vmatmul.mubr.bf16.gmra.mrb[0].mxu0 %v119
    %v155 = vpop.f32.mrb[0].mxu0
    %v156 = vadd.f32 %v92, %v155
    %v157 = vpop.f32.mrb[0].mxu0
    %v158 = vpop.f32.mrb[0].mxu0
    %v159 = vadd.f32 %v92, %v158
    %v160 = vpop.f32.mrb[0].mxu0
    %161 = vdwg.mxu0
    %v162 = vmax.f32 %v156, 0.0
    %v163 = vmax.f32 %v159, 0.0
    %v164 = vpack.c.bf16 %v163, %v162
    %v165 = vld [vmem:[#allocation7] sm:$0xf]
    %v166 = vld [vmem:[#allocation7 + $0x4] sm:$0xf]
    %v167 = vld [vmem:[#allocation7 + $0x8] sm:$0xf]
    %v168 = vld [vmem:[#allocation7 + $0xc] sm:$0xf]
    %v169 = vld [vmem:[#allocation7 + $0x10] sm:$0xf]
    %v170 = vld [vmem:[#allocation7 + $0x14] sm:$0xf]
    %v171 = vld [vmem:[#allocation7 + $0x18] sm:$0xf]
    %v172 = vld [vmem:[#allocation7 + $0x1c] sm:$0xf]
    %v173 = vld [vmem:[#allocation7 + $0x20] sm:$0xf]
    %v174 = vld [vmem:[#allocation7 + $0x24] sm:$0xf]
    %v175 = vld [vmem:[#allocation7 + $0x28] sm:$0xf]
    %v176 = vld [vmem:[#allocation7 + $0x2c] sm:$0xf]
    %v177 = vld [vmem:[#allocation7 + $0x30] sm:$0xf]
    %v178 = vld [vmem:[#allocation7 + $0x34] sm:$0xf]
    %v179 = vld [vmem:[#allocation7 + $0x38] sm:$0xf]
    %v180 = vld [vmem:[#allocation7 + $0x3c] sm:$0xf]
    %v181 = vld [vmem:[%s4 + $0x1] sm:$0x1]
    %v182 = vlaneseq
    %v183 = vshrl.u32 %v182, 7
    %v184 = vsub.s32 0, %v183
    %v185 = vrot.slane %v181, %v184
    %v202 = vunpack.c.l.b16 %v165
    %v203 = vunpack.c.l.b16 %v166
    %v204 = vunpack.c.l.b16 %v167
    %v205 = vunpack.c.l.b16 %v168
    %v206 = vunpack.c.l.b16 %v169
    %v207 = vunpack.c.l.b16 %v170
    %v208 = vunpack.c.l.b16 %v171
    %v209 = vunpack.c.l.b16 %v172
    %v210 = vunpack.c.l.b16 %v173
    %v211 = vunpack.c.l.b16 %v174
    %v212 = vunpack.c.l.b16 %v175
    %v213 = vunpack.c.l.b16 %v176
    %v214 = vunpack.c.l.b16 %v177
    %v215 = vunpack.c.l.b16 %v178
    %v216 = vunpack.c.l.b16 %v179
    %v217 = vunpack.c.l.b16 %v180
    %v218 = vpack.c.b16 %v203, %v202
    %v219 = vpack.c.b16 %v205, %v204
    %v220 = vpack.c.b16 %v207, %v206
    %v221 = vpack.c.b16 %v209, %v208
    %v222 = vpack.c.b16 %v211, %v210
    %v223 = vpack.c.b16 %v213, %v212
    %v224 = vpack.c.b16 %v215, %v214
    %v225 = vpack.c.b16 %v217, %v216
    %234 = vmatprep.subr.bf16.mxu0 0
    %235 = vmatpush1.bf16.msra.mxu0 %v218
    %236 = vmatprep.subr.bf16.mxu0 0
    %237 = vmatpush1.bf16.msra.mxu0 %v219
    %238 = vmatprep.subr.bf16.mxu0 0
    %239 = vmatpush1.bf16.msra.mxu0 %v220
    %240 = vmatprep.subr.bf16.mxu0 0
    %241 = vmatpush1.bf16.msra.mxu0 %v221
    %242 = vmatprep.subr.bf16.mxu0 0
    %243 = vmatpush1.bf16.msra.mxu0 %v222
    %244 = vmatprep.subr.bf16.mxu0 0
    %245 = vmatpush1.bf16.msra.mxu0 %v223
    %246 = vmatprep.subr.bf16.mxu0 0
    %247 = vmatpush1.bf16.msra.mxu0 %v224
    %248 = vmatprep.subr.bf16.mxu0 0
    %249 = vmatpush1.bf16.msra.mxu0 %v225
    %250 = vmatprep.subr.bf16.mxu0 0
    %251 = vmatpush1.bf16.msra.mxu0 0
    %252 = vmatprep.subr.bf16.mxu0 0
    %253 = vmatpush1.bf16.msra.mxu0 0
    %254 = vmatprep.subr.bf16.mxu0 0
    %255 = vmatpush1.bf16.msra.mxu0 0
    %256 = vmatprep.subr.bf16.mxu0 0
    %257 = vmatpush1.bf16.msra.mxu0 0
    %258 = vmatprep.subr.bf16.mxu0 0
    %259 = vmatpush1.bf16.msra.mxu0 0
    %260 = vmatprep.subr.bf16.mxu0 0
    %261 = vmatpush1.bf16.msra.mxu0 0
    %262 = vmatprep.subr.bf16.mxu0 0
    %263 = vmatpush1.bf16.msra.mxu0 0
    %264 = vmatprep.subr.bf16.mxu0 0
    %265 = vmatpush1.bf16.msra.mxu0 0
    %266 = vmatprep.mubr.bf16.mxu0 0
    %267 = vmatmul.mubr.bf16.gmra.mrb[0].mxu0 %v164
    %v268 = vpop.f32.mrb[0].mxu0
    %v269 = vadd.f32 %v185, %v268
    %v270 = vpop.f32.mrb[0].mxu0
    %v271 = vpop.f32.mrb[0].mxu0
    %v272 = vadd.f32 %v185, %v271
    %v273 = vpop.f32.mrb[0].mxu0
    %274 = vdwg.mxu0
    %v275 = vmax.f32 %v269, 0.0
    %v276 = vmax.f32 %v272, 0.0
    %v277 = vpack.c.bf16 %v276, %v275
    %v278 = vld [vmem:[#allocation8] sm:$0xf]
    %v279 = vld [vmem:[#allocation8 + $0x4] sm:$0xf]
    %v280 = vld [vmem:[#allocation8 + $0x8] sm:$0xf]
    %v281 = vld [vmem:[#allocation8 + $0xc] sm:$0xf]
    %v282 = vld [vmem:[#allocation8 + $0x10] sm:$0xf]
    %v283 = vld [vmem:[#allocation8 + $0x14] sm:$0xf]
    %v284 = vld [vmem:[#allocation8 + $0x18] sm:$0xf]
    %v285 = vld [vmem:[#allocation8 + $0x1c] sm:$0xf]
    %v286 = vld [vmem:[#allocation8 + $0x20] sm:$0xf]
    %v287 = vld [vmem:[#allocation8 + $0x24] sm:$0xf]
    %v288 = vld [vmem:[#allocation8 + $0x28] sm:$0xf]
    %v289 = vld [vmem:[#allocation8 + $0x2c] sm:$0xf]
    %v290 = vld [vmem:[#allocation8 + $0x30] sm:$0xf]
    %v291 = vld [vmem:[#allocation8 + $0x34] sm:$0xf]
    %v292 = vld [vmem:[#allocation8 + $0x38] sm:$0xf]
    %v293 = vld [vmem:[#allocation8 + $0x3c] sm:$0xf]
    %v294 = vld [vmem:[%s4 + $0x2] sm:$0x1]
    %v295 = vlaneseq
    %v296 = vshrl.u32 %v295, 7
    %v297 = vsub.s32 0, %v296
    %v298 = vrot.slane %v294, %v297
    %v315 = vunpack.c.l.b16 %v278
    %v316 = vunpack.c.l.b16 %v279
    %v317 = vunpack.c.l.b16 %v280
    %v318 = vunpack.c.l.b16 %v281
    %v319 = vunpack.c.l.b16 %v282
    %v320 = vunpack.c.l.b16 %v283
    %v321 = vunpack.c.l.b16 %v284
    %v322 = vunpack.c.l.b16 %v285
    %v323 = vunpack.c.l.b16 %v286
    %v324 = vunpack.c.l.b16 %v287
    %v325 = vunpack.c.l.b16 %v288
    %v326 = vunpack.c.l.b16 %v289
    %v327 = vunpack.c.l.b16 %v290
    %v328 = vunpack.c.l.b16 %v291
    %v329 = vunpack.c.l.b16 %v292
    %v330 = vunpack.c.l.b16 %v293
    %v331 = vpack.c.b16 %v316, %v315
    %v332 = vpack.c.b16 %v318, %v317
    %v333 = vpack.c.b16 %v320, %v319
    %v334 = vpack.c.b16 %v322, %v321
    %v335 = vpack.c.b16 %v324, %v323
    %v336 = vpack.c.b16 %v326, %v325
    %v337 = vpack.c.b16 %v328, %v327
    %v338 = vpack.c.b16 %v330, %v329
    %347 = vmatprep.subr.bf16.mxu0 0
    %348 = vmatpush1.bf16.msra.mxu0 %v331
    %349 = vmatprep.subr.bf16.mxu0 0
    %350 = vmatpush1.bf16.msra.mxu0 %v332
    %351 = vmatprep.subr.bf16.mxu0 0
    %352 = vmatpush1.bf16.msra.mxu0 %v333
    %353 = vmatprep.subr.bf16.mxu0 0
    %354 = vmatpush1.bf16.msra.mxu0 %v334
    %355 = vmatprep.subr.bf16.mxu0 0
    %356 = vmatpush1.bf16.msra.mxu0 %v335
    %357 = vmatprep.subr.bf16.mxu0 0
    %358 = vmatpush1.bf16.msra.mxu0 %v336
    %359 = vmatprep.subr.bf16.mxu0 0
    %360 = vmatpush1.bf16.msra.mxu0 %v337
    %361 = vmatprep.subr.bf16.mxu0 0
    %362 = vmatpush1.bf16.msra.mxu0 %v338
    %363 = vmatprep.subr.bf16.mxu0 0
    %364 = vmatpush1.bf16.msra.mxu0 0
    %365 = vmatprep.subr.bf16.mxu0 0
    %366 = vmatpush1.bf16.msra.mxu0 0
    %367 = vmatprep.subr.bf16.mxu0 0
    %368 = vmatpush1.bf16.msra.mxu0 0
    %369 = vmatprep.subr.bf16.mxu0 0
    %370 = vmatpush1.bf16.msra.mxu0 0
    %371 = vmatprep.subr.bf16.mxu0 0
    %372 = vmatpush1.bf16.msra.mxu0 0
    %373 = vmatprep.subr.bf16.mxu0 0
    %374 = vmatpush1.bf16.msra.mxu0 0
    %375 = vmatprep.subr.bf16.mxu0 0
    %376 = vmatpush1.bf16.msra.mxu0 0
    %377 = vmatprep.subr.bf16.mxu0 0
    %378 = vmatpush1.bf16.msra.mxu0 0
    %379 = vmatprep.mubr.bf16.mxu0 0
    %380 = vmatmul.mubr.bf16.gmra.mrb[0].mxu0 %v277
    %v381 = vpop.f32.mrb[0].mxu0
    %v382 = vadd.f32 %v298, %v381
    %v383 = vpop.f32.mrb[0].mxu0
    %v384 = vpop.f32.mrb[0].mxu0
    %v385 = vadd.f32 %v298, %v384
    %v386 = vpop.f32.mrb[0].mxu0
    %387 = vdwg.mxu0
    %v388 = vmax.f32 %v382, 0.0
    %v389 = vmax.f32 %v385, 0.0
    %v390 = vxor.u32 %v388, 2147483648
    %v391 = vxor.u32 %v389, 2147483648
    %v392 = vmul.f32 %v390, 1.442695
    %v393 = vpow.pop %v392
    %v394 = vmul.f32 %v391, 1.442695
    %v395 = vpow.pop %v394
    %v396 = vadd.f32 %v393, 1.0
    %v397 = vadd.f32 %v395, 1.0
    %v398 = vrcp.pop %v396
    %v399 = vmul.f32 1.0, %v398
    %v400 = vrcp.pop %v397
    %v401 = vmul.f32 1.0, %v400
    %v402 = vpack.c.bf16 %v401, %v399
    %v404 = vunpack.c.l.b16 %v402
    %v405 = vunpack.c.h.b16 %v402
    %v406 = vpack.c.b16 %v404, %v404
    %v407 = vpack.c.b16 %v405, %v405
    %410 = vst [vmem:[#allocation10] sm:$0xf] %v406
    %411 = vst [vmem:[#allocation10 + $0x4] sm:$0xf] %v407
    // Predicated region
    $region38: #{tpu_custom_call.1} parent=1 // pred_check
      _
    $region39: #{tpu_custom_call.1} parent=1 // pred_check_branch
      %413 = sbr.rel (0) target = $region41
    $region40: #{tpu_custom_call.1} parent=1 // pred_region
      %s415 = ssub.s32 128, 128
      %416 = vsyncadd [#allocation4], %s415
      %s417 = sshll.u32 [#allocation10], 4
      %s418 = int_to_ptr.vmem [resolvable:$true] %s417
      %423 = dma.vmem_to_hbm [thread:$0]  %s418, 128, %s5, [#allocation4], 64, 64, 4
    $region41: #{tpu_custom_call.1} parent=1 // pred_fallthru
      _
    // Predicated region
    $region42: #{tpu_custom_call.1} parent=1 // pred_check
      _
    $region43: #{tpu_custom_call.1} parent=1 // pred_check_branch
      %425 = sbr.rel (0) target = $region45
    $region44: #{tpu_custom_call.1} parent=1 // pred_region
      %426 = dma.done [#allocation4], 128
    $region45: #{tpu_custom_call.1} parent=1 // pred_fallthru
      _
    %427 = vsyncpa [#allocation3], 1
    %428 = vsyncpa [#allocation6], 1
    %429 = vsyncpa [#allocation9], 1
    %430 = vsyncpa [#allocation4], 1

// kernel: tpu_custom_call.1
$region0: #{tpu_custom_call.1}
  #allocation0 [shape = 'u32[]', space=smem, size = 0x4, offset = 0x4, fixed_abs, tag = 'smem constant byte address 0x4 - core index']
  #allocation1 [shape = 'u32[144,128]{1,0:T(1,128)}', space=vmem, size = 0x12000, scoped, tag = 'internal scratch']
  %s0 = inlined_call_operand.hbm [shape: f32[16,64], index: 0, kind: input, shape index: {}]
  %s1 = inlined_call_operand.hbm [shape: bf16[64,128], index: 1, kind: input, shape index: {}]
  %s2 = inlined_call_operand.hbm [shape: bf16[128,128], index: 2, kind: input, shape index: {}]
  %s3 = inlined_call_operand.hbm [shape: bf16[128,128], index: 3, kind: input, shape index: {}]
  %s4 = inlined_call_operand.vmem [shape: f32[3,128], index: 4, kind: input, shape index: {}]
  %s5 = inlined_call_operand.hbm [shape: bf16[16,128], index: 5, kind: output, shape index: {}]
  %s6 = sld [smem:[#allocation0]]
  $region46: #{tpu_custom_call.1} parent=0
    _
  %s8 = ssub.s32 1, %s6
  %s9 = scalar_select 0, %s8, %s6
  $region1: #{tpu_custom_call.1} parent=0
    #allocation2 [shape = 'u8[8192]{0}', space=vmem, size = 0x2000, scoped, tag = 'input window, operand 0, single buffered']
    #allocation3 [shape = 's32[1]{0}', space=sflag, size = 0x4, scoped, tag = 'scoped memory for tpu_custom_call.1']
    #allocation4 [shape = 's32[1]{0}', space=sflag, size = 0x4, scoped, tag = 'scoped memory for tpu_custom_call.1']
    #allocation5 [shape = 'u8[16384]{0}', space=vmem, size = 0x4000, scoped, tag = 'input window, operand 1, single buffered']
    #allocation6 [shape = 's32[1]{0}', space=sflag, size = 0x4, scoped, tag = 'scoped memory for tpu_custom_call.1']
    #allocation7 [shape = 'u8[32768]{0}', space=vmem, size = 0x8000, scoped, tag = 'input window, operand 2, single buffered']
    #allocation8 [shape = 'u8[32768]{0}', space=vmem, size = 0x8000, scoped, tag = 'input window, operand 3, single buffered']
    #allocation9 [shape = 's32[1]{0}', space=sflag, size = 0x4, scoped, tag = 'scoped memory for tpu_custom_call.1']
    #allocation10 [shape = 'u8[4096]{0}', space=vmem, size = 0x1000, scoped, tag = 'output window, operand 0, single buffered']
    %10 = vsyncpa [#allocation3], 0
    %11 = vsyncpa [#allocation6], 0
    %12 = vsyncpa [#allocation9], 0
    %13 = vsyncpa [#allocation4], 0
    // Predicated region
    $region2: #{tpu_custom_call.1} parent=1 // pred_check
      _
    $region3: #{tpu_custom_call.1} parent=1 // pred_check_branch
      %15 = sbr.rel (0) target = $region5
    $region4: #{tpu_custom_call.1} parent=1 // pred_region
      %s17 = ssub.s32 256, 256
      %18 = vsyncadd [#allocation3], %s17
      %s19 = sshll.u32 [#allocation2], 4
      %s20 = int_to_ptr.vmem [resolvable:$true] %s19
      %25 = dma.hbm_to_vmem [thread:$0]  %s0, 256, %s20, [#allocation3], 128, 128, 8
    $region5: #{tpu_custom_call.1} parent=1 // pred_fallthru
      _
    // Predicated region
    $region6: #{tpu_custom_call.1} parent=1 // pred_check
      _
    $region7: #{tpu_custom_call.1} parent=1 // pred_check_branch
      %27 = sbr.rel (0) target = $region9
    $region8: #{tpu_custom_call.1} parent=1 // pred_region
      %s29 = ssub.s32 512, 512
      %30 = vsyncadd [#allocation6], %s29
      %s31 = sshll.u32 [#allocation5], 4
      %s32 = int_to_ptr.vmem [resolvable:$true] %s31
      %37 = dma.hbm_to_vmem [thread:$0]  %s1, 512, %s32, [#allocation6], 64, 64, 4
    $region9: #{tpu_custom_call.1} parent=1 // pred_fallthru
      _
    // Predicated region
    $region10: #{tpu_custom_call.1} parent=1 // pred_check
      _
    $region11: #{tpu_custom_call.1} parent=1 // pred_check_branch
      %39 = sbr.rel (0) target = $region13
    $region12: #{tpu_custom_call.1} parent=1 // pred_region
      %s41 = ssub.s32 1024, 1024
      %42 = vsyncadd [#allocation6], %s41
      %s43 = sshll.u32 [#allocation7], 4
      %s44 = int_to_ptr.vmem [resolvable:$true] %s43
      %49 = dma.hbm_to_vmem [thread:$0]  %s2, 1024, %s44, [#allocation6], 64, 64, 4
    $region13: #{tpu_custom_call.1} parent=1 // pred_fallthru
      _
    // Predicated region
    $region14: #{tpu_custom_call.1} parent=1 // pred_check
      _
    $region15: #{tpu_custom_call.1} parent=1 // pred_check_branch
      %51 = sbr.rel (0) target = $region17
    $region16: #{tpu_custom_call.1} parent=1 // pred_region
      %s53 = ssub.s32 1024, 1024
      %54 = vsyncadd [#allocation9], %s53
      %s55 = sshll.u32 [#allocation8], 4
      %s56 = int_to_ptr.vmem [resolvable:$true] %s55
      %61 = dma.hbm_to_vmem [thread:$0]  %s3, 1024, %s56, [#allocation9], 64, 64, 4
    $region17: #{tpu_custom_call.1} parent=1 // pred_fallthru
      _
    // Predicated region
    $region18: #{tpu_custom_call.1} parent=1 // pred_check
      _
    $region19: #{tpu_custom_call.1} parent=1 // pred_check_branch
      %63 = sbr.rel (0) target = $region21
    $region20: #{tpu_custom_call.1} parent=1 // pred_region
      _
    $region21: #{tpu_custom_call.1} parent=1 // pred_fallthru
      _
    // Predicated region
    $region22: #{tpu_custom_call.1} parent=1 // pred_check
      _
    $region23: #{tpu_custom_call.1} parent=1 // pred_check_branch
      %65 = sbr.rel (0) target = $region25
    $region24: #{tpu_custom_call.1} parent=1 // pred_region
      %66 = dma.done [#allocation3], 256
    $region25: #{tpu_custom_call.1} parent=1 // pred_fallthru
      _
    // Predicated region
    $region26: #{tpu_custom_call.1} parent=1 // pred_check
      _
    $region27: #{tpu_custom_call.1} parent=1 // pred_check_branch
      %68 = sbr.rel (0) target = $region29
    $region28: #{tpu_custom_call.1} parent=1 // pred_region
      %69 = dma.done [#allocation6], 512
    $region29: #{tpu_custom_call.1} parent=1 // pred_fallthru
      _
    // Predicated region
    $region30: #{tpu_custom_call.1} parent=1 // pred_check
      _
    $region31: #{tpu_custom_call.1} parent=1 // pred_check_branch
      %71 = sbr.rel (0) target = $region33
    $region32: #{tpu_custom_call.1} parent=1 // pred_region
      %72 = dma.done [#allocation6], 1024
    $region33: #{tpu_custom_call.1} parent=1 // pred_fallthru
      _
    // Predicated region
    $region34: #{tpu_custom_call.1} parent=1 // pred_check
      _
    $region35: #{tpu_custom_call.1} parent=1 // pred_check_branch
      %74 = sbr.rel (0) target = $region37
    $region36: #{tpu_custom_call.1} parent=1 // pred_region
      %75 = dma.done [#allocation9], 1024
    $region37: #{tpu_custom_call.1} parent=1 // pred_fallthru
      _
    %v77 = vld [vmem:[#allocation2] sm:$0xff]
    %v78 = vld [vmem:[#allocation2 + $0x8] sm:$0xff]
    %v79 = vpack.c.bf16 %v78, %v77
    %v80 = vld [vmem:[#allocation5] sm:$0xf]
    %v81 = vld [vmem:[#allocation5 + $0x4] sm:$0xf]
    %v82 = vld [vmem:[#allocation5 + $0x8] sm:$0xf]
    %v83 = vld [vmem:[#allocation5 + $0xc] sm:$0xf]
    %v84 = vld [vmem:[#allocation5 + $0x10] sm:$0xf]
    %v85 = vld [vmem:[#allocation5 + $0x14] sm:$0xf]
    %v86 = vld [vmem:[#allocation5 + $0x18] sm:$0xf]
    %v87 = vld [vmem:[#allocation5 + $0x1c] sm:$0xf]
    %v88 = vld [vmem:[%s4] sm:$0x1]
    %v89 = vlaneseq
    %v90 = vshrl.u32 %v89, 7
    %v91 = vsub.s32 0, %v90
    %v92 = vrot.slane %v88, %v91
    %v101 = vunpack.c.l.b16 %v80
    %v102 = vunpack.c.l.b16 %v81
    %v103 = vunpack.c.l.b16 %v82
    %v104 = vunpack.c.l.b16 %v83
    %v105 = vunpack.c.l.b16 %v84
    %v106 = vunpack.c.l.b16 %v85
    %v107 = vunpack.c.l.b16 %v86
    %v108 = vunpack.c.l.b16 %v87
    %v109 = vpack.c.b16 %v102, %v101
    %v110 = vpack.c.b16 %v104, %v103
    %v111 = vpack.c.b16 %v106, %v105
    %v112 = vpack.c.b16 %v108, %v107
    %vm117 = vcmask 523264
    %v119 = vsel %vm117, %v79, 0
    %121 = vmatprep.subr.bf16.mxu0 0
    %122 = vmatpush1.bf16.msra.mxu0 %v109
    %123 = vmatprep.subr.bf16.mxu0 0
    %124 = vmatpush1.bf16.msra.mxu0 %v110
    %125 = vmatprep.subr.bf16.mxu0 0
    %126 = vmatpush1.bf16.msra.mxu0 %v111
    %127 = vmatprep.subr.bf16.mxu0 0
    %128 = vmatpush1.bf16.msra.mxu0 %v112
    %129 = vmatprep.subr.bf16.mxu0 0
    %130 = vmatpush1.bf16.msra.mxu0 0
    %131 = vmatprep.subr.bf16.mxu0 0
    %132 = vmatpush1.bf16.msra.mxu0 0
    %133 = vmatprep.subr.bf16.mxu0 0
    %134 = vmatpush1.bf16.msra.mxu0 0
    %135 = vmatprep.subr.bf16.mxu0 0
    %136 = vmatpush1.bf16.msra.mxu0 0
    %137 = vmatprep.subr.bf16.mxu0 0
    %138 = vmatpush1.bf16.msra.mxu0 0
    %139 = vmatprep.subr.bf16.mxu0 0
    %140 = vmatpush1.bf16.msra.mxu0 0
    %141 = vmatprep.subr.bf16.mxu0 0
    %142 = vmatpush1.bf16.msra.mxu0 0
    %143 = vmatprep.subr.bf16.mxu0 0
    %144 = vmatpush1.bf16.msra.mxu0 0
    %145 = vmatprep.subr.bf16.mxu0 0
    %146 = vmatpush1.bf16.msra.mxu0 0
    %147 = vmatprep.subr.bf16.mxu0 0
    %148 = vmatpush1.bf16.msra.mxu0 0
    %149 = vmatprep.subr.bf16.mxu0 0
    %150 = vmatpush1.bf16.msra.mxu0 0
    %151 = vmatprep.subr.bf16.mxu0 0
    %152 = vmatpush1.bf16.msra.mxu0 0
    %153 = vmatprep.mubr.bf16.mxu0 0
    %154 = vmatmul.mubr.bf16.gmra.mrb[0].mxu0 %v119
    %v155 = vpop.f32.mrb[0].mxu0
    %v156 = vadd.f32 %v92, %v155
    %v157 = vpop.f32.mrb[0].mxu0
    %v158 = vpop.f32.mrb[0].mxu0
    %v159 = vadd.f32 %v92, %v158
    %v160 = vpop.f32.mrb[0].mxu0
    %161 = vdwg.mxu0
    %v162 = vmax.f32 %v156, 0.0
    %v163 = vmax.f32 %v159, 0.0
    %v164 = vpack.c.bf16 %v163, %v162
    %v165 = vld [vmem:[#allocation7] sm:$0xf]
    %v166 = vld [vmem:[#allocation7 + $0x4] sm:$0xf]
    %v167 = vld [vmem:[#allocation7 + $0x8] sm:$0xf]
    %v168 = vld [vmem:[#allocation7 + $0xc] sm:$0xf]
    %v169 = vld [vmem:[#allocation7 + $0x10] sm:$0xf]
    %v170 = vld [vmem:[#allocation7 + $0x14] sm:$0xf]
    %v171 = vld [vmem:[#allocation7 + $0x18] sm:$0xf]
    %v172 = vld [vmem:[#allocation7 + $0x1c] sm:$0xf]
    %v173 = vld [vmem:[#allocation7 + $0x20] sm:$0xf]
    %v174 = vld [vmem:[#allocation7 + $0x24] sm:$0xf]
    %v175 = vld [vmem:[#allocation7 + $0x28] sm:$0xf]
    %v176 = vld [vmem:[#allocation7 + $0x2c] sm:$0xf]
    %v177 = vld [vmem:[#allocation7 + $0x30] sm:$0xf]
    %v178 = vld [vmem:[#allocation7 + $0x34] sm:$0xf]
    %v179 = vld [vmem:[#allocation7 + $0x38] sm:$0xf]
    %v180 = vld [vmem:[#allocation7 + $0x3c] sm:$0xf]
    %v181 = vld [vmem:[%s4 + $0x1] sm:$0x1]
    %v182 = vlaneseq
    %v183 = vshrl.u32 %v182, 7
    %v184 = vsub.s32 0, %v183
    %v185 = vrot.slane %v181, %v184
    %v202 = vunpack.c.l.b16 %v165
    %v203 = vunpack.c.l.b16 %v166
    %v204 = vunpack.c.l.b16 %v167
    %v205 = vunpack.c.l.b16 %v168
    %v206 = vunpack.c.l.b16 %v169
    %v207 = vunpack.c.l.b16 %v170
    %v208 = vunpack.c.l.b16 %v171
    %v209 = vunpack.c.l.b16 %v172
    %v210 = vunpack.c.l.b16 %v173
    %v211 = vunpack.c.l.b16 %v174
    %v212 = vunpack.c.l.b16 %v175
    %v213 = vunpack.c.l.b16 %v176
    %v214 = vunpack.c.l.b16 %v177
    %v215 = vunpack.c.l.b16 %v178
    %v216 = vunpack.c.l.b16 %v179
    %v217 = vunpack.c.l.b16 %v180
    %v218 = vpack.c.b16 %v203, %v202
    %v219 = vpack.c.b16 %v205, %v204
    %v220 = vpack.c.b16 %v207, %v206
    %v221 = vpack.c.b16 %v209, %v208
    %v222 = vpack.c.b16 %v211, %v210
    %v223 = vpack.c.b16 %v213, %v212
    %v224 = vpack.c.b16 %v215, %v214
    %v225 = vpack.c.b16 %v217, %v216
    %234 = vmatprep.subr.bf16.mxu0 0
    %235 = vmatpush1.bf16.msra.mxu0 %v218
    %236 = vmatprep.subr.bf16.mxu0 0
    %237 = vmatpush1.bf16.msra.mxu0 %v219
    %238 = vmatprep.subr.bf16.mxu0 0
    %239 = vmatpush1.bf16.msra.mxu0 %v220
    %240 = vmatprep.subr.bf16.mxu0 0
    %241 = vmatpush1.bf16.msra.mxu0 %v221
    %242 = vmatprep.subr.bf16.mxu0 0
    %243 = vmatpush1.bf16.msra.mxu0 %v222
    %244 = vmatprep.subr.bf16.mxu0 0
    %245 = vmatpush1.bf16.msra.mxu0 %v223
    %246 = vmatprep.subr.bf16.mxu0 0
    %247 = vmatpush1.bf16.msra.mxu0 %v224
    %248 = vmatprep.subr.bf16.mxu0 0
    %249 = vmatpush1.bf16.msra.mxu0 %v225
    %250 = vmatprep.subr.bf16.mxu0 0
    %251 = vmatpush1.bf16.msra.mxu0 0
    %252 = vmatprep.subr.bf16.mxu0 0
    %253 = vmatpush1.bf16.msra.mxu0 0
    %254 = vmatprep.subr.bf16.mxu0 0
    %255 = vmatpush1.bf16.msra.mxu0 0
    %256 = vmatprep.subr.bf16.mxu0 0
    %257 = vmatpush1.bf16.msra.mxu0 0
    %258 = vmatprep.subr.bf16.mxu0 0
    %259 = vmatpush1.bf16.msra.mxu0 0
    %260 = vmatprep.subr.bf16.mxu0 0
    %261 = vmatpush1.bf16.msra.mxu0 0
    %262 = vmatprep.subr.bf16.mxu0 0
    %263 = vmatpush1.bf16.msra.mxu0 0
    %264 = vmatprep.subr.bf16.mxu0 0
    %265 = vmatpush1.bf16.msra.mxu0 0
    %266 = vmatprep.mubr.bf16.mxu0 0
    %267 = vmatmul.mubr.bf16.gmra.mrb[0].mxu0 %v164
    %v268 = vpop.f32.mrb[0].mxu0
    %v269 = vadd.f32 %v185, %v268
    %v270 = vpop.f32.mrb[0].mxu0
    %v271 = vpop.f32.mrb[0].mxu0
    %v272 = vadd.f32 %v185, %v271
    %v273 = vpop.f32.mrb[0].mxu0
    %274 = vdwg.mxu0
    %v275 = vmax.f32 %v269, 0.0
    %v276 = vmax.f32 %v272, 0.0
    %v277 = vpack.c.bf16 %v276, %v275
    %v278 = vld [vmem:[#allocation8] sm:$0xf]
    %v279 = vld [vmem:[#allocation8 + $0x4] sm:$0xf]
    %v280 = vld [vmem:[#allocation8 + $0x8] sm:$0xf]
    %v281 = vld [vmem:[#allocation8 + $0xc] sm:$0xf]
    %v282 = vld [vmem:[#allocation8 + $0x10] sm:$0xf]
    %v283 = vld [vmem:[#allocation8 + $0x14] sm:$0xf]
    %v284 = vld [vmem:[#allocation8 + $0x18] sm:$0xf]
    %v285 = vld [vmem:[#allocation8 + $0x1c] sm:$0xf]
    %v286 = vld [vmem:[#allocation8 + $0x20] sm:$0xf]
    %v287 = vld [vmem:[#allocation8 + $0x24] sm:$0xf]
    %v288 = vld [vmem:[#allocation8 + $0x28] sm:$0xf]
    %v289 = vld [vmem:[#allocation8 + $0x2c] sm:$0xf]
    %v290 = vld [vmem:[#allocation8 + $0x30] sm:$0xf]
    %v291 = vld [vmem:[#allocation8 + $0x34] sm:$0xf]
    %v292 = vld [vmem:[#allocation8 + $0x38] sm:$0xf]
    %v293 = vld [vmem:[#allocation8 + $0x3c] sm:$0xf]
    %v294 = vld [vmem:[%s4 + $0x2] sm:$0x1]
    %v295 = vlaneseq
    %v296 = vshrl.u32 %v295, 7
    %v297 = vsub.s32 0, %v296
    %v298 = vrot.slane %v294, %v297
    %v315 = vunpack.c.l.b16 %v278
    %v316 = vunpack.c.l.b16 %v279
    %v317 = vunpack.c.l.b16 %v280
    %v318 = vunpack.c.l.b16 %v281
    %v319 = vunpack.c.l.b16 %v282
    %v320 = vunpack.c.l.b16 %v283
    %v321 = vunpack.c.l.b16 %v284
    %v322 = vunpack.c.l.b16 %v285
    %v323 = vunpack.c.l.b16 %v286
    %v324 = vunpack.c.l.b16 %v287
    %v325 = vunpack.c.l.b16 %v288
    %v326 = vunpack.c.l.b16 %v289
    %v327 = vunpack.c.l.b16 %v290
    %v328 = vunpack.c.l.b16 %v291
    %v329 = vunpack.c.l.b16 %v292
    %v330 = vunpack.c.l.b16 %v293
    %v331 = vpack.c.b16 %v316, %v315
    %v332 = vpack.c.b16 %v318, %v317
    %v333 = vpack.c.b16 %v320, %v319
    %v334 = vpack.c.b16 %v322, %v321
    %v335 = vpack.c.b16 %v324, %v323
    %v336 = vpack.c.b16 %v326, %v325
    %v337 = vpack.c.b16 %v328, %v327
    %v338 = vpack.c.b16 %v330, %v329
    %347 = vmatprep.subr.bf16.mxu0 0
    %348 = vmatpush1.bf16.msra.mxu0 %v331
    %349 = vmatprep.subr.bf16.mxu0 0
    %350 = vmatpush1.bf16.msra.mxu0 %v332
    %351 = vmatprep.subr.bf16.mxu0 0
    %352 = vmatpush1.bf16.msra.mxu0 %v333
    %353 = vmatprep.subr.bf16.mxu0 0
    %354 = vmatpush1.bf16.msra.mxu0 %v334
    %355 = vmatprep.subr.bf16.mxu0 0
    %356 = vmatpush1.bf16.msra.mxu0 %v335
    %357 = vmatprep.subr.bf16.mxu0 0
    %358 = vmatpush1.bf16.msra.mxu0 %v336
    %359 = vmatprep.subr.bf16.mxu0 0
    %360 = vmatpush1.bf16.msra.mxu0 %v337
    %361 = vmatprep.subr.bf16.mxu0 0
    %362 = vmatpush1.bf16.msra.mxu0 %v338
    %363 = vmatprep.subr.bf16.mxu0 0
    %364 = vmatpush1.bf16.msra.mxu0 0
    %365 = vmatprep.subr.bf16.mxu0 0
    %366 = vmatpush1.bf16.msra.mxu0 0
    %367 = vmatprep.subr.bf16.mxu0 0
    %368 = vmatpush1.bf16.msra.mxu0 0
    %369 = vmatprep.subr.bf16.mxu0 0
    %370 = vmatpush1.bf16.msra.mxu0 0
    %371 = vmatprep.subr.bf16.mxu0 0
    %372 = vmatpush1.bf16.msra.mxu0 0
    %373 = vmatprep.subr.bf16.mxu0 0
    %374 = vmatpush1.bf16.msra.mxu0 0
    %375 = vmatprep.subr.bf16.mxu0 0
    %376 = vmatpush1.bf16.msra.mxu0 0
    %377 = vmatprep.subr.bf16.mxu0 0
    %378 = vmatpush1.bf16.msra.mxu0 0
    %379 = vmatprep.mubr.bf16.mxu0 0
    %380 = vmatmul.mubr.bf16.gmra.mrb[0].mxu0 %v277
    %v381 = vpop.f32.mrb[0].mxu0
    %v382 = vadd.f32 %v298, %v381
    %v383 = vpop.f32.mrb[0].mxu0
    %v384 = vpop.f32.mrb[0].mxu0
    %v385 = vadd.f32 %v298, %v384
    %v386 = vpop.f32.mrb[0].mxu0
    %387 = vdwg.mxu0
    %v388 = vmax.f32 %v382, 0.0
    %v389 = vmax.f32 %v385, 0.0
    %v390 = vxor.u32 %v388, 2147483648
    %v391 = vxor.u32 %v389, 2147483648
    %v392 = vmul.f32 %v390, 1.442695
    %v393 = vpow.pop %v392
    %v394 = vmul.f32 %v391, 1.442695
    %v395 = vpow.pop %v394
    %v396 = vadd.f32 %v393, 1.0
    %v397 = vadd.f32 %v395, 1.0
    %v398 = vrcp.pop %v396
    %v399 = vmul.f32 1.0, %v398
    %v400 = vrcp.pop %v397
    %v401 = vmul.f32 1.0, %v400
    %v402 = vpack.c.bf16 %v401, %v399
    %v404 = vunpack.c.l.b16 %v402
    %v405 = vunpack.c.h.b16 %v402
    %v406 = vpack.c.b16 %v404, %v404
    %v407 = vpack.c.b16 %v405, %v405
    %410 = vst [vmem:[#allocation10] sm:$0xf] %v406
    %411 = vst [vmem:[#allocation10 + $0x4] sm:$0xf] %v407
    // Predicated region
    $region38: #{tpu_custom_call.1} parent=1 // pred_check
      _
    $region39: #{tpu_custom_call.1} parent=1 // pred_check_branch
      %413 = sbr.rel (0) target = $region41
    $region40: #{tpu_custom_call.1} parent=1 // pred_region
      %s415 = ssub.s32 128, 128
      %416 = vsyncadd [#allocation4], %s415
      %s417 = sshll.u32 [#allocation10], 4
      %s418 = int_to_ptr.vmem [resolvable:$true] %s417
      %423 = dma.vmem_to_hbm [thread:$0]  %s418, 128, %s5, [#allocation4], 64, 64, 4
    $region41: #{tpu_custom_call.1} parent=1 // pred_fallthru
      _
    // Predicated region
    $region42: #{tpu_custom_call.1} parent=1 // pred_check
      _
    $region43: #{tpu_custom_call.1} parent=1 // pred_check_branch
      %425 = sbr.rel (0) target = $region45
    $region44: #{tpu_custom_call.1} parent=1 // pred_region
      %426 = dma.done [#allocation4], 128
    $region45: #{tpu_custom_call.1} parent=1 // pred_fallthru
      _
    %427 = vsyncpa [#allocation3], 1
    %428 = vsyncpa [#allocation6], 1
    %429 = vsyncpa [#allocation9], 1
    %430 = vsyncpa [#allocation4], 1

</llo_original>
